<compile_context>
chip_gen: v7x
topology: tpu7x:2x2x1
jax: 0.10.0
libtpu: 0.0.40
codegen_flags: <defaults>
</compile_context>

<pallas_src>
import functools

import jax
import jax.numpy as jnp
from jax.experimental import pallas as pl
from jax.experimental.pallas import tpu as pltpu


def _round_up(x, m):
    return ((x + m - 1) // m) * m


# ---------------------------------------------------------------------------
# Kernel
#   grid = (row_tiles, hidden_tiles); hidden axis is the reduction axis.
#   refs: x, gamma, beta, w1(dim_p, te), b1(1, te), w2(te, dim_p), b2(1, dim_p)
#   scratch: xn (bf16, LN output reused across k), acc (f32 accumulator)
# ---------------------------------------------------------------------------
def _block_kernel(x_ref, g_ref, beta_ref, w1_ref, b1_ref, w2_ref, b2_ref,
                  o_ref, xn_ref, acc_ref, *, true_dim):
    k = pl.program_id(1)

    @pl.when(k == 0)
    def _init():
        x = x_ref[...].astype(jnp.float32)                    # (tile_n, dim_p)
        inv_d = 1.0 / true_dim                                # real (unpadded) dim
        s1 = jnp.sum(x, axis=-1, keepdims=True)               # single pass:
        s2 = jnp.sum(x * x, axis=-1, keepdims=True)           #  sum & sum-of-squares
        mu = s1 * inv_d
        var = jnp.maximum(s2 * inv_d - mu * mu, 0.0)
        xn = (x - mu) * jax.lax.rsqrt(var + 1e-5)
        xn = xn * g_ref[...] + beta_ref[...]                  # padded lanes -> 0 (gamma=0)
        xn_ref[...] = xn.astype(xn_ref.dtype)                 # cache bf16 for MXU
        acc_ref[...] = jnp.zeros_like(acc_ref)

    # Linear1 (hidden tile) + activation, bf16 MXU path with f32 accumulate.
    h = jnp.dot(xn_ref[...], w1_ref[...], preferred_element_type=jnp.float32)
    h = h + b1_ref[...]
    h = jax.nn.gelu(h)  # TODO(synk): activation is config-dependent (nn_cfg.mlp.activation)

    # Linear2 partial for this hidden tile, accumulated in f32.
    acc_ref[...] += jnp.dot(h.astype(w2_ref.dtype), w2_ref[...],
                            preferred_element_type=jnp.float32)

    @pl.when(k == pl.num_programs(1) - 1)
    def _store():
        y = x_ref[...].astype(jnp.float32) + acc_ref[...] + b2_ref[...]
        o_ref[...] = y.astype(o_ref.dtype)


# ---------------------------------------------------------------------------
# Wrapper
# ---------------------------------------------------------------------------
@functools.partial(jax.jit, static_argnames=("tile_n", "tile_e"))
def block_forward(x, gamma, beta, w1, b1, w2, b2, *, tile_n=256, tile_e=512):
    """x: [..., dim] -> [..., dim]. w1: (dim, exp), w2: (exp, dim)."""
    orig_shape = x.shape
    dim = orig_shape[-1]
    exp = w1.shape[-1]
    x2 = x.reshape(-1, dim)                                   # [N, dim]
    n = x2.shape[0]

    # Lane-dense padding of the feature / hidden dims (multiples of 128).
    dim_p = _round_up(dim, 128)
    te = min(_round_up(tile_e, 128), _round_up(exp, 128))     # hidden tile
    exp_p = _round_up(exp, te)

    # Row tiling: multiple of 8, shrunk for small inputs, rows padded (no assert).
    tn = min(_round_up(tile_n, 8), _round_up(n, 8))
    n_p = _round_up(n, tn)

    f32 = jnp.float32
    x_p = jnp.pad(x2.astype(f32), ((0, n_p - n), (0, dim_p - dim)))
    g_p = jnp.pad(gamma.astype(f32), (0, dim_p - dim)).reshape(1, dim_p)
    be_p = jnp.pad(beta.astype(f32), (0, dim_p - dim)).reshape(1, dim_p)
    # Weights in bf16 for the MXU fast path (accumulation stays f32 in-kernel).
    w1_p = jnp.pad(w1.astype(f32), ((0, dim_p - dim), (0, exp_p - exp))).astype(jnp.bfloat16)
    w2_p = jnp.pad(w2.astype(f32), ((0, exp_p - exp), (0, dim_p - dim))).astype(jnp.bfloat16)
    b1_p = jnp.pad(b1.astype(f32), (0, exp_p - exp)).reshape(1, exp_p)
    b2_p = jnp.pad(b2.astype(f32), (0, dim_p - dim)).reshape(1, dim_p)

    grid = (n_p // tn, exp_p // te)
    kernel = functools.partial(_block_kernel, true_dim=dim)

    out = pl.pallas_call(
        kernel,
        out_shape=jax.ShapeDtypeStruct((n_p, dim_p), x.dtype),
        grid_spec=pltpu.PrefetchScalarGridSpec(
            num_scalar_prefetch=0,
            grid=grid,
            in_specs=[
                pl.BlockSpec((tn, dim_p), lambda i, k: (i, 0)),   # x row tile (resident over k)
                pl.BlockSpec((1, dim_p), lambda i, k: (0, 0)),    # ln gamma
                pl.BlockSpec((1, dim_p), lambda i, k: (0, 0)),    # ln beta
                pl.BlockSpec((dim_p, te), lambda i, k: (0, k)),   # w1 hidden tile (streamed)
                pl.BlockSpec((1, te), lambda i, k: (0, k)),       # b1 hidden tile
                pl.BlockSpec((te, dim_p), lambda i, k: (k, 0)),   # w2 hidden tile (streamed)
                pl.BlockSpec((1, dim_p), lambda i, k: (0, 0)),    # b2
            ],
            out_specs=pl.BlockSpec((tn, dim_p), lambda i, k: (i, 0)),
            scratch_shapes=[
                pltpu.VMEM((tn, dim_p), jnp.bfloat16),            # cached LN output
                pltpu.VMEM((tn, dim_p), jnp.float32),             # f32 accumulator
            ],
        ),
        compiler_params=pltpu.CompilerParams(
            dimension_semantics=("parallel", "arbitrary"),
            vmem_limit_bytes=48 * 1024 * 1024,
        ),
    )(x_p, g_p, be_p, w1_p, b1_p, w2_p, b2_p)

    return out[:n, :dim].reshape(orig_shape)


# ---------------------------------------------------------------------------
# Deterministic parameter init (mirrors torch.nn.init.orthogonal_ semantics)
# ---------------------------------------------------------------------------
def orthogonal(key, out_features, in_features, std):
    rows, cols = out_features, in_features
    a = jax.random.normal(key, (max(rows, cols), min(rows, cols)), jnp.float32)
    q, r = jnp.linalg.qr(a)
    q = q * jnp.sign(jnp.diagonal(r))
    if rows < cols:
        q = q.T
    return (std * q[:rows, :cols]).astype(jnp.float32)        # (out, in), torch layout


if __name__ == "__main__":
    dim = 32           # feature size
    expansion_dim = 4  # matches module default (absolute hidden width)
    batch, seq = 2, 8

    key = jax.random.PRNGKey(0)
    kx, k1, k2 = jax.random.split(key, 3)

    x = jax.random.normal(kx, (batch, seq, dim), jnp.float32)

    # fn = Linear(dim, exp, std=1/exp) -> act -> Linear(exp, dim, std=1/dim)
    w1_t = orthogonal(k1, expansion_dim, dim, std=1.0 / expansion_dim)  # (exp, dim)
    w2_t = orthogonal(k2, dim, expansion_dim, std=1.0 / dim)            # (dim, exp)
    w1 = w1_t.T            # (dim, exp) for x @ w1
    w2 = w2_t.T            # (exp, dim) for h @ w2
    b1 = jnp.zeros((expansion_dim,), jnp.float32)
    b2 = jnp.zeros((dim,), jnp.float32)

    # LayerNorm params (torch defaults)
    gamma = jnp.ones((dim,), jnp.float32)
    beta = jnp.zeros((dim,), jnp.float32)

    out = block_forward(x, gamma, beta, w1, b1, w2, b2)
    jax.block_until_ready(out)

    # quick sanity check against a pure-JAX f32 reference (kernel matmuls are
    # bf16-on-MXU, so use a bf16-appropriate tolerance).
    def ref(x):
        mu = jnp.mean(x, -1, keepdims=True)
        var = jnp.mean((x - mu) ** 2, -1, keepdims=True)
        xn = (x - mu) / jnp.sqrt(var + 1e-5) * gamma + beta
        h = jax.nn.gelu(xn @ w1 + b1)
        return x + (h @ w2 + b2)

    assert jnp.allclose(out, ref(x), atol=2e-2, rtol=2e-2), "mismatch vs reference"
    print("KERNEL_OK")
</pallas_src>

<mosaic_0001>
module attributes {stable_mosaic.version = 11 : i64} {
  func.func @_block_kernel(%arg0: i32, %arg1: i32, %arg2: memref<16x128xf32, #tpu.memory_space<vmem>>, %arg3: memref<1x128xf32, #tpu.memory_space<vmem>>, %arg4: memref<1x128xf32, #tpu.memory_space<vmem>>, %arg5: memref<128x128xbf16, #tpu.memory_space<vmem>>, %arg6: memref<1x128xf32, #tpu.memory_space<vmem>>, %arg7: memref<128x128xbf16, #tpu.memory_space<vmem>>, %arg8: memref<1x128xf32, #tpu.memory_space<vmem>>, %arg9: memref<16x128xf32, #tpu.memory_space<vmem>>, %arg10: memref<16x128xbf16, #tpu.memory_space<vmem>>, %arg11: memref<16x128xf32, #tpu.memory_space<vmem>>) attributes {dimension_semantics = [#tpu.dimension_semantics<parallel>, #tpu.dimension_semantics<arbitrary>], iteration_bounds = array<i64: 1, 1>, scalar_prefetch = 0 : i64, scratch_operands = 2 : i64, tpu.core_type = #tpu.core_type<tc>, window_params = [{transform_indices = @transform_0, window_bounds = array<i64: 16, 128>}, {pipeline_mode = #tpu.pipeline_mode<synchronous>, transform_indices = @transform_1, window_bounds = array<i64: 1, 128>}, {pipeline_mode = #tpu.pipeline_mode<synchronous>, transform_indices = @transform_2, window_bounds = array<i64: 1, 128>}, {transform_indices = @transform_3, window_bounds = array<i64: 128, 128>}, {transform_indices = @transform_4, window_bounds = array<i64: 1, 128>}, {transform_indices = @transform_5, window_bounds = array<i64: 128, 128>}, {pipeline_mode = #tpu.pipeline_mode<synchronous>, transform_indices = @transform_6, window_bounds = array<i64: 1, 128>}, {transform_indices = @transform_7, window_bounds = array<i64: 16, 128>}]} {
    %c0_i32 = arith.constant 0 : i32
    %0 = arith.cmpi eq, %arg1, %c0_i32 : i32
    %1 = arith.extui %0 : i1 to i32
    %c0_i32_0 = arith.constant 0 : i32
    %2 = arith.cmpi ne, %1, %c0_i32_0 : i32
    scf.if %2 {
      %c0_19 = arith.constant 0 : index
      %c0_20 = arith.constant 0 : index
      %31 = vector.load %arg2[%c0_19, %c0_20] : memref<16x128xf32, #tpu.memory_space<vmem>>, vector<16x128xf32>
      %cst_21 = arith.constant dense<0.000000e+00> : vector<16xf32>
      %32 = vector.multi_reduction <add>, %31, %cst_21 [1] : vector<16x128xf32> to vector<16xf32>
      %33 = vector.shape_cast %32 : vector<16xf32> to vector<16x1xf32>
      %34 = arith.mulf %31, %31 : vector<16x128xf32>
      %cst_22 = arith.constant dense<0.000000e+00> : vector<16xf32>
      %35 = vector.multi_reduction <add>, %34, %cst_22 [1] : vector<16x128xf32> to vector<16xf32>
      %36 = vector.shape_cast %35 : vector<16xf32> to vector<16x1xf32>
      %cst_23 = arith.constant 3.125000e-02 : f32
      %37 = vector.broadcast %cst_23 : f32 to vector<16x1xf32>
      %38 = arith.mulf %33, %37 : vector<16x1xf32>
      %cst_24 = arith.constant 3.125000e-02 : f32
      %39 = vector.broadcast %cst_24 : f32 to vector<16x1xf32>
      %40 = arith.mulf %36, %39 : vector<16x1xf32>
      %41 = arith.mulf %38, %38 : vector<16x1xf32>
      %42 = arith.subf %40, %41 : vector<16x1xf32>
      %cst_25 = arith.constant 0.000000e+00 : f32
      %43 = vector.broadcast %cst_25 : f32 to vector<16x1xf32>
      %44 = arith.maximumf %42, %43 : vector<16x1xf32>
      %45 = vector.broadcast %38 : vector<16x1xf32> to vector<16x128xf32>
      %46 = arith.subf %31, %45 : vector<16x128xf32>
      %cst_26 = arith.constant 9.99999974E-6 : f32
      %47 = vector.broadcast %cst_26 : f32 to vector<16x1xf32>
      %48 = arith.addf %44, %47 : vector<16x1xf32>
      %49 = math.rsqrt %48 : vector<16x1xf32>
      %50 = vector.broadcast %49 : vector<16x1xf32> to vector<16x128xf32>
      %51 = arith.mulf %46, %50 : vector<16x128xf32>
      %c0_27 = arith.constant 0 : index
      %c0_28 = arith.constant 0 : index
      %52 = vector.load %arg3[%c0_27, %c0_28] : memref<1x128xf32, #tpu.memory_space<vmem>>, vector<1x128xf32>
      %53 = vector.broadcast %52 : vector<1x128xf32> to vector<16x128xf32>
      %54 = arith.mulf %51, %53 : vector<16x128xf32>
      %c0_29 = arith.constant 0 : index
      %c0_30 = arith.constant 0 : index
      %55 = vector.load %arg4[%c0_29, %c0_30] : memref<1x128xf32, #tpu.memory_space<vmem>>, vector<1x128xf32>
      %56 = vector.broadcast %55 : vector<1x128xf32> to vector<16x128xf32>
      %57 = arith.addf %54, %56 : vector<16x128xf32>
      %58 = arith.truncf %57 : vector<16x128xf32> to vector<16x128xbf16>
      %c0_31 = arith.constant 0 : index
      %c0_32 = arith.constant 0 : index
      %59 = vector.load %arg10[%c0_31, %c0_32] : memref<16x128xbf16, #tpu.memory_space<vmem>>, vector<16x128xbf16>
      tpu.vector_store %arg10[%c0_31, %c0_32], %58 {strides = array<i32>} : memref<16x128xbf16, #tpu.memory_space<vmem>>, vector<16x128xbf16>,
      %cst_33 = arith.constant 0.000000e+00 : f32
      %60 = vector.broadcast %cst_33 : f32 to vector<16x128xf32>
      %c0_34 = arith.constant 0 : index
      %c0_35 = arith.constant 0 : index
      %61 = vector.load %arg11[%c0_34, %c0_35] : memref<16x128xf32, #tpu.memory_space<vmem>>, vector<16x128xf32>
      tpu.vector_store %arg11[%c0_34, %c0_35], %60 {strides = array<i32>} : memref<16x128xf32, #tpu.memory_space<vmem>>, vector<16x128xf32>,
    } else {
    }
    %c0 = arith.constant 0 : index
    %c0_1 = arith.constant 0 : index
    %3 = vector.load %arg10[%c0, %c0_1] : memref<16x128xbf16, #tpu.memory_space<vmem>>, vector<16x128xbf16>
    %c0_2 = arith.constant 0 : index
    %c0_3 = arith.constant 0 : index
    %4 = vector.load %arg5[%c0_2, %c0_3] : memref<128x128xbf16, #tpu.memory_space<vmem>>, vector<128x128xbf16>
    %cst = arith.constant dense<0.000000e+00> : vector<16x128xf32>
    %5 = tpu.matmul %3, %4, %cst {dimension_numbers = #tpu.dot_dimension_numbers<[1], [0], [0], [1], [0, 0, 1, 1], [], []>} : vector<16x128xbf16>, vector<128x128xbf16>, vector<16x128xf32> -> vector<16x128xf32>
    %c0_4 = arith.constant 0 : index
    %c0_5 = arith.constant 0 : index
    %6 = vector.load %arg6[%c0_4, %c0_5] : memref<1x128xf32, #tpu.memory_space<vmem>>, vector<1x128xf32>
    %7 = vector.broadcast %6 : vector<1x128xf32> to vector<16x128xf32>
    %8 = arith.addf %5, %7 : vector<16x128xf32>
    %9 = arith.mulf %8, %8 : vector<16x128xf32>
    %10 = arith.mulf %8, %9 : vector<16x128xf32>
    %cst_6 = arith.constant 4.471500e-02 : f32
    %11 = vector.broadcast %cst_6 : f32 to vector<16x128xf32>
    %12 = arith.mulf %11, %10 : vector<16x128xf32>
    %13 = arith.addf %8, %12 : vector<16x128xf32>
    %cst_7 = arith.constant 0.797884583 : f32
    %14 = vector.broadcast %cst_7 : f32 to vector<16x128xf32>
    %15 = arith.mulf %14, %13 : vector<16x128xf32>
    %16 = math.tanh %15 : vector<16x128xf32>
    %cst_8 = arith.constant 1.000000e+00 : f32
    %17 = vector.broadcast %cst_8 : f32 to vector<16x128xf32>
    %18 = arith.addf %17, %16 : vector<16x128xf32>
    %cst_9 = arith.constant 5.000000e-01 : f32
    %19 = vector.broadcast %cst_9 : f32 to vector<16x128xf32>
    %20 = arith.mulf %19, %18 : vector<16x128xf32>
    %21 = arith.mulf %8, %20 : vector<16x128xf32>
    %c0_10 = arith.constant 0 : index
    %c0_11 = arith.constant 0 : index
    %22 = vector.load %arg11[%c0_10, %c0_11] : memref<16x128xf32, #tpu.memory_space<vmem>>, vector<16x128xf32>
    %23 = arith.truncf %21 : vector<16x128xf32> to vector<16x128xbf16>
    %c0_12 = arith.constant 0 : index
    %c0_13 = arith.constant 0 : index
    %24 = vector.load %arg7[%c0_12, %c0_13] : memref<128x128xbf16, #tpu.memory_space<vmem>>, vector<128x128xbf16>
    %cst_14 = arith.constant dense<0.000000e+00> : vector<16x128xf32>
    %25 = tpu.matmul %23, %24, %cst_14 {dimension_numbers = #tpu.dot_dimension_numbers<[1], [0], [0], [1], [0, 0, 1, 1], [], []>} : vector<16x128xbf16>, vector<128x128xbf16>, vector<16x128xf32> -> vector<16x128xf32>
    %26 = arith.addf %22, %25 : vector<16x128xf32>
    %c0_15 = arith.constant 0 : index
    %c0_16 = arith.constant 0 : index
    %27 = vector.load %arg11[%c0_15, %c0_16] : memref<16x128xf32, #tpu.memory_space<vmem>>, vector<16x128xf32>
    tpu.vector_store %arg11[%c0_15, %c0_16], %26 {strides = array<i32>} : memref<16x128xf32, #tpu.memory_space<vmem>>, vector<16x128xf32>,
    %c0_i32_17 = arith.constant 0 : i32
    %28 = arith.cmpi eq, %arg1, %c0_i32_17 : i32
    %29 = arith.extui %28 : i1 to i32
    %c0_i32_18 = arith.constant 0 : i32
    %30 = arith.cmpi ne, %29, %c0_i32_18 : i32
    scf.if %30 {
      %c0_19 = arith.constant 0 : index
      %c0_20 = arith.constant 0 : index
      %31 = vector.load %arg2[%c0_19, %c0_20] : memref<16x128xf32, #tpu.memory_space<vmem>>, vector<16x128xf32>
      %c0_21 = arith.constant 0 : index
      %c0_22 = arith.constant 0 : index
      %32 = vector.load %arg11[%c0_21, %c0_22] : memref<16x128xf32, #tpu.memory_space<vmem>>, vector<16x128xf32>
      %33 = arith.addf %31, %32 : vector<16x128xf32>
      %c0_23 = arith.constant 0 : index
      %c0_24 = arith.constant 0 : index
      %34 = vector.load %arg8[%c0_23, %c0_24] : memref<1x128xf32, #tpu.memory_space<vmem>>, vector<1x128xf32>
      %35 = vector.broadcast %34 : vector<1x128xf32> to vector<16x128xf32>
      %36 = arith.addf %33, %35 : vector<16x128xf32>
      %c0_25 = arith.constant 0 : index
      %c0_26 = arith.constant 0 : index
      %37 = vector.load %arg9[%c0_25, %c0_26] : memref<16x128xf32, #tpu.memory_space<vmem>>, vector<16x128xf32>
      tpu.vector_store %arg9[%c0_25, %c0_26], %36 {strides = array<i32>} : memref<16x128xf32, #tpu.memory_space<vmem>>, vector<16x128xf32>,
    } else {
    }
    return
  }
  func.func @transform_0(%arg0: i32, %arg1: i32) -> (i32, i32) {
    %c0_i32 = arith.constant 0 : i32
    %c0_i32_0 = arith.constant 0 : i32
    return %arg0, %c0_i32 : i32, i32
  }
  func.func @transform_1(%arg0: i32, %arg1: i32) -> (i32, i32) {
    %c0_i32 = arith.constant 0 : i32
    %c0_i32_0 = arith.constant 0 : i32
    %c0_i32_1 = arith.constant 0 : i32
    return %c0_i32, %c0_i32_0 : i32, i32
  }
  func.func @transform_2(%arg0: i32, %arg1: i32) -> (i32, i32) {
    %c0_i32 = arith.constant 0 : i32
    %c0_i32_0 = arith.constant 0 : i32
    %c0_i32_1 = arith.constant 0 : i32
    return %c0_i32, %c0_i32_0 : i32, i32
  }
  func.func @transform_3(%arg0: i32, %arg1: i32) -> (i32, i32) {
    %c0_i32 = arith.constant 0 : i32
    %c0_i32_0 = arith.constant 0 : i32
    return %c0_i32, %arg1 : i32, i32
  }
  func.func @transform_4(%arg0: i32, %arg1: i32) -> (i32, i32) {
    %c0_i32 = arith.constant 0 : i32
    %c0_i32_0 = arith.constant 0 : i32
    return %c0_i32, %arg1 : i32, i32
  }
  func.func @transform_5(%arg0: i32, %arg1: i32) -> (i32, i32) {
    %c0_i32 = arith.constant 0 : i32
    %c0_i32_0 = arith.constant 0 : i32
    return %arg1, %c0_i32 : i32, i32
  }
  func.func @transform_6(%arg0: i32, %arg1: i32) -> (i32, i32) {
    %c0_i32 = arith.constant 0 : i32
    %c0_i32_0 = arith.constant 0 : i32
    %c0_i32_1 = arith.constant 0 : i32
    return %c0_i32, %c0_i32_0 : i32, i32
  }
  func.func @transform_7(%arg0: i32, %arg1: i32) -> (i32, i32) {
    %c0_i32 = arith.constant 0 : i32
    %c0_i32_0 = arith.constant 0 : i32
    return %arg0, %c0_i32 : i32, i32
  }
}

</mosaic_0001>

<llo_original>
// kernel: block_forward.1
$region0: #{block_forward.1}
  #allocation0 [shape = 'u32[]', space=smem, size = 0x4, offset = 0x4, fixed_abs, tag = 'smem constant byte address 0x4 - core index']
  #allocation1 [shape = 'u32[144,128]{1,0:T(1,128)}', space=vmem, size = 0x12000, scoped, tag = 'internal scratch']
  #allocation2 [shape = 'bf16[16,128]{1,0:T(16,128)(2,1)}', space=vmem, size = 0x1000, scoped, tag = 'scratch operand']
  #allocation3 [shape = 'f32[16,128]{1,0:T(8,128)}', space=vmem, size = 0x2000, scoped, tag = 'scratch operand']
  %s0 = inlined_call_operand.vmem [shape: f32[16,128], index: 0, kind: input, shape index: {}]
  %s1 = inlined_call_operand.vmem [shape: f32[1,128], index: 1, kind: input, shape index: {}]
  %s2 = inlined_call_operand.vmem [shape: f32[1,128], index: 2, kind: input, shape index: {}]
  %s3 = inlined_call_operand.vmem [shape: bf16[128,128], index: 3, kind: input, shape index: {}]
  %s4 = inlined_call_operand.vmem [shape: f32[1,128], index: 4, kind: input, shape index: {}]
  %s5 = inlined_call_operand.vmem [shape: bf16[128,128], index: 5, kind: input, shape index: {}]
  %s6 = inlined_call_operand.vmem [shape: f32[1,128], index: 6, kind: input, shape index: {}]
  %s7 = inlined_call_operand.vmem [shape: f32[16,128], index: 7, kind: output, shape index: {}]
  %s8 = sld [smem:[#allocation0]]
  $region46: #{block_forward.1} parent=0
    _
  %s10 = ssub.s32 1, %s8
  %s11 = scalar_select 0, %s10, %s8
  // Predicated region
  $region2: #{block_forward.1} parent=0 // pred_check
    _
  $region3: #{block_forward.1} parent=0 // pred_check_branch
    %13 = sbr.rel (0) target = $region5
  $region4: #{block_forward.1} parent=0 // pred_region
    _
  $region5: #{block_forward.1} parent=0 // pred_fallthru
    _
  // Predicated region
  $region6: #{block_forward.1} parent=0 // pred_check
    _
  $region7: #{block_forward.1} parent=0 // pred_check_branch
    %15 = sbr.rel (0) target = $region9
  $region8: #{block_forward.1} parent=0 // pred_region
    _
  $region9: #{block_forward.1} parent=0 // pred_fallthru
    _
  // Predicated region
  $region10: #{block_forward.1} parent=0 // pred_check
    _
  $region11: #{block_forward.1} parent=0 // pred_check_branch
    %17 = sbr.rel (0) target = $region13
  $region12: #{block_forward.1} parent=0 // pred_region
    _
  $region13: #{block_forward.1} parent=0 // pred_fallthru
    _
  // Predicated region
  $region14: #{block_forward.1} parent=0 // pred_check
    _
  $region15: #{block_forward.1} parent=0 // pred_check_branch
    %19 = sbr.rel (0) target = $region17
  $region16: #{block_forward.1} parent=0 // pred_region
    _
  $region17: #{block_forward.1} parent=0 // pred_fallthru
    _
  // Predicated region
  $region18: #{block_forward.1} parent=0 // pred_check
    _
  $region19: #{block_forward.1} parent=0 // pred_check_branch
    %21 = sbr.rel (0) target = $region21
  $region20: #{block_forward.1} parent=0 // pred_region
    _
  $region21: #{block_forward.1} parent=0 // pred_fallthru
    _
  // Predicated region
  $region22: #{block_forward.1} parent=0 // pred_check
    _
  $region23: #{block_forward.1} parent=0 // pred_check_branch
    %23 = sbr.rel (0) target = $region25
  $region24: #{block_forward.1} parent=0 // pred_region
    _
  $region25: #{block_forward.1} parent=0 // pred_fallthru
    _
  // Predicated region
  $region26: #{block_forward.1} parent=0 // pred_check
    _
  $region27: #{block_forward.1} parent=0 // pred_check_branch
    %25 = sbr.rel (0) target = $region29
  $region28: #{block_forward.1} parent=0 // pred_region
    _
  $region29: #{block_forward.1} parent=0 // pred_fallthru
    _
  %p27 = scmp.eq.s32.totalorder 0, 0
  // Predicated region
  $region30: #{block_forward.1} parent=0 // pred_check
    %p28 = pneg %p27
  $region31: #{block_forward.1} parent=0 // pred_check_branch
    %30 = sbr.rel (%p28) target = $region33
  $region32: #{block_forward.1} parent=0 // pred_region
    %v31 = vld [vmem:[%s0] sm:$0xff]
    %v32 = vld [vmem:[%s0 + $0x8] sm:$0xff]
    %33 = vadd.xlane.f32.xlu0 %v31
    %v34 = vpop.xlane.xlu0 %33
    %35 = vadd.xlane.f32.xlu0 %v32
    %v36 = vpop.xlane.xlu0 %35
    %v37 = vmul.f32 %v31, %v31
    %v38 = vmul.f32 %v32, %v32
    %39 = vadd.xlane.f32.xlu0 %v37
    %v40 = vpop.xlane.xlu0 %39
    %41 = vadd.xlane.f32.xlu0 %v38
    %v42 = vpop.xlane.xlu0 %41
    %v43 = vmul.f32 %v34, 0.03125
    %v44 = vmul.f32 %v36, 0.03125
    %v45 = vmul.f32 %v40, 0.03125
    %v46 = vmul.f32 %v42, 0.03125
    %v47 = vmul.f32 %v43, %v43
    %v48 = vmul.f32 %v44, %v44
    %v49 = vsub.f32 %v45, %v47
    %v50 = vsub.f32 %v46, %v48
    %v51 = vmax.f32 %v49, 0.0
    %v52 = vmax.f32 %v50, 0.0
    %v53 = vsub.f32 %v31, %v43
    %v54 = vsub.f32 %v32, %v44
    %v55 = vadd.f32 %v51, 1e-05
    %v56 = vadd.f32 %v52, 1e-05
    %v57 = vrsqrt.pop %v55
    %v58 = vrsqrt.pop %v56
    %v59 = vmul.f32 %v53, %v57
    %v60 = vmul.f32 %v54, %v58
    %v61 = vld [vmem:[%s1] sm:$0x1]
    %v63 = vlaneseq
    %v64 = vshrl.u32 %v63, 7
    %v65 = vsub.s32 0, %v64
    %v66 = vrot.slane %v61, %v65
    %v68 = vmul.f32 %v59, %v66
    %v69 = vmul.f32 %v60, %v66
    %v70 = vld [vmem:[%s2] sm:$0x1]
    %v72 = vlaneseq
    %v73 = vshrl.u32 %v72, 7
    %v74 = vsub.s32 0, %v73
    %v75 = vrot.slane %v70, %v74
    %v77 = vadd.f32 %v68, %v75
    %v78 = vadd.f32 %v69, %v75
    %v79 = vpack.c.bf16 %v78, %v77
    %80 = vst [vmem:[#allocation2] sm:$0xff] %v79
    %81 = vst [vmem:[#allocation3] sm:$0xff] 0.0
    %82 = vst [vmem:[#allocation3 + $0x8] sm:$0xff] 0.0
  $region33: #{block_forward.1} parent=0 // pred_fallthru
    _
  %v83 = vld [vmem:[#allocation2] sm:$0xff]
  %v84 = vld [vmem:[%s3] sm:$0xf]
  %v85 = vld [vmem:[%s3 + $0x4] sm:$0xf]
  %v86 = vld [vmem:[%s3 + $0x8] sm:$0xf]
  %v87 = vld [vmem:[%s3 + $0xc] sm:$0xf]
  %v88 = vld [vmem:[%s3 + $0x10] sm:$0xf]
  %v89 = vld [vmem:[%s3 + $0x14] sm:$0xf]
  %v90 = vld [vmem:[%s3 + $0x18] sm:$0xf]
  %v91 = vld [vmem:[%s3 + $0x1c] sm:$0xf]
  %v92 = vld [vmem:[%s3 + $0x20] sm:$0xf]
  %v93 = vld [vmem:[%s3 + $0x24] sm:$0xf]
  %v94 = vld [vmem:[%s3 + $0x28] sm:$0xf]
  %v95 = vld [vmem:[%s3 + $0x2c] sm:$0xf]
  %v96 = vld [vmem:[%s3 + $0x30] sm:$0xf]
  %v97 = vld [vmem:[%s3 + $0x34] sm:$0xf]
  %v98 = vld [vmem:[%s3 + $0x38] sm:$0xf]
  %v99 = vld [vmem:[%s3 + $0x3c] sm:$0xf]
  %v100 = vld [vmem:[%s4] sm:$0x1]
  %v102 = vlaneseq
  %v103 = vshrl.u32 %v102, 7
  %v104 = vsub.s32 0, %v103
  %v105 = vrot.slane %v100, %v104
  %v123 = vunpack.c.l.b16 %v84
  %v124 = vunpack.c.l.b16 %v85
  %v125 = vunpack.c.l.b16 %v86
  %v126 = vunpack.c.l.b16 %v87
  %v127 = vunpack.c.l.b16 %v88
  %v128 = vunpack.c.l.b16 %v89
  %v129 = vunpack.c.l.b16 %v90
  %v130 = vunpack.c.l.b16 %v91
  %v131 = vunpack.c.l.b16 %v92
  %v132 = vunpack.c.l.b16 %v93
  %v133 = vunpack.c.l.b16 %v94
  %v134 = vunpack.c.l.b16 %v95
  %v135 = vunpack.c.l.b16 %v96
  %v136 = vunpack.c.l.b16 %v97
  %v137 = vunpack.c.l.b16 %v98
  %v138 = vunpack.c.l.b16 %v99
  %v139 = vpack.c.b16 %v124, %v123
  %v140 = vpack.c.b16 %v126, %v125
  %v141 = vpack.c.b16 %v128, %v127
  %v142 = vpack.c.b16 %v130, %v129
  %v143 = vpack.c.b16 %v132, %v131
  %v144 = vpack.c.b16 %v134, %v133
  %v145 = vpack.c.b16 %v136, %v135
  %v146 = vpack.c.b16 %v138, %v137
  %155 = vmatprep.subr.bf16.mxu0 0
  %156 = vmatpush1.bf16.msra.mxu0 %v139
  %157 = vmatprep.subr.bf16.mxu0 0
  %158 = vmatpush1.bf16.msra.mxu0 %v140
  %159 = vmatprep.subr.bf16.mxu0 0
  %160 = vmatpush1.bf16.msra.mxu0 %v141
  %161 = vmatprep.subr.bf16.mxu0 0
  %162 = vmatpush1.bf16.msra.mxu0 %v142
  %163 = vmatprep.subr.bf16.mxu0 0
  %164 = vmatpush1.bf16.msra.mxu0 %v143
  %165 = vmatprep.subr.bf16.mxu0 0
  %166 = vmatpush1.bf16.msra.mxu0 %v144
  %167 = vmatprep.subr.bf16.mxu0 0
  %168 = vmatpush1.bf16.msra.mxu0 %v145
  %169 = vmatprep.subr.bf16.mxu0 0
  %170 = vmatpush1.bf16.msra.mxu0 %v146
  %171 = vmatprep.subr.bf16.mxu0 0
  %172 = vmatpush1.bf16.msra.mxu0 0
  %173 = vmatprep.subr.bf16.mxu0 0
  %174 = vmatpush1.bf16.msra.mxu0 0
  %175 = vmatprep.subr.bf16.mxu0 0
  %176 = vmatpush1.bf16.msra.mxu0 0
  %177 = vmatprep.subr.bf16.mxu0 0
  %178 = vmatpush1.bf16.msra.mxu0 0
  %179 = vmatprep.subr.bf16.mxu0 0
  %180 = vmatpush1.bf16.msra.mxu0 0
  %181 = vmatprep.subr.bf16.mxu0 0
  %182 = vmatpush1.bf16.msra.mxu0 0
  %183 = vmatprep.subr.bf16.mxu0 0
  %184 = vmatpush1.bf16.msra.mxu0 0
  %185 = vmatprep.subr.bf16.mxu0 0
  %186 = vmatpush1.bf16.msra.mxu0 0
  %187 = vmatprep.mubr.bf16.mxu0 0
  %188 = vmatmul.mubr.bf16.gmra.mrb[0].mxu0 %v83
  %v189 = vpop.f32.mrb[0].mxu0
  %v190 = vadd.f32 %v105, %v189
  %v191 = vpop.f32.mrb[0].mxu0
  %v192 = vpop.f32.mrb[0].mxu0
  %v193 = vadd.f32 %v105, %v192
  %v194 = vpop.f32.mrb[0].mxu0
  %195 = vdwg.mxu0
  %v196 = vmul.f32 %v190, %v190
  %v197 = vmul.f32 %v193, %v193
  %v198 = vmul.f32 %v190, %v196
  %v199 = vmul.f32 %v193, %v197
  %v200 = vmul.f32 %v198, 0.044715
  %v201 = vmul.f32 %v199, 0.044715
  %v202 = vadd.f32 %v190, %v200
  %v203 = vadd.f32 %v193, %v201
  %v204 = vmul.f32 %v202, 0.7978846
  %v205 = vmul.f32 %v203, 0.7978846
  %v206 = vtanh.pop %v204
  %v207 = vtanh.pop %v205
  %v208 = vadd.f32 %v206, 1.0
  %v209 = vadd.f32 %v207, 1.0
  %v210 = vmul.f32 %v208, 0.5
  %v211 = vmul.f32 %v209, 0.5
  %v212 = vmul.f32 %v190, %v210
  %v213 = vmul.f32 %v193, %v211
  %v214 = vld [vmem:[#allocation3] sm:$0xff]
  %v215 = vld [vmem:[#allocation3 + $0x8] sm:$0xff]
  %v216 = vpack.c.bf16 %v213, %v212
  %v217 = vld [vmem:[%s5] sm:$0xf]
  %v218 = vld [vmem:[%s5 + $0x4] sm:$0xf]
  %v219 = vld [vmem:[%s5 + $0x8] sm:$0xf]
  %v220 = vld [vmem:[%s5 + $0xc] sm:$0xf]
  %v221 = vld [vmem:[%s5 + $0x10] sm:$0xf]
  %v222 = vld [vmem:[%s5 + $0x14] sm:$0xf]
  %v223 = vld [vmem:[%s5 + $0x18] sm:$0xf]
  %v224 = vld [vmem:[%s5 + $0x1c] sm:$0xf]
  %v225 = vld [vmem:[%s5 + $0x20] sm:$0xf]
  %v226 = vld [vmem:[%s5 + $0x24] sm:$0xf]
  %v227 = vld [vmem:[%s5 + $0x28] sm:$0xf]
  %v228 = vld [vmem:[%s5 + $0x2c] sm:$0xf]
  %v229 = vld [vmem:[%s5 + $0x30] sm:$0xf]
  %v230 = vld [vmem:[%s5 + $0x34] sm:$0xf]
  %v231 = vld [vmem:[%s5 + $0x38] sm:$0xf]
  %v232 = vld [vmem:[%s5 + $0x3c] sm:$0xf]
  %v249 = vunpack.c.l.b16 %v217
  %v250 = vunpack.c.l.b16 %v218
  %v251 = vunpack.c.l.b16 %v219
  %v252 = vunpack.c.l.b16 %v220
  %v253 = vunpack.c.l.b16 %v221
  %v254 = vunpack.c.l.b16 %v222
  %v255 = vunpack.c.l.b16 %v223
  %v256 = vunpack.c.l.b16 %v224
  %v257 = vunpack.c.l.b16 %v225
  %v258 = vunpack.c.l.b16 %v226
  %v259 = vunpack.c.l.b16 %v227
  %v260 = vunpack.c.l.b16 %v228
  %v261 = vunpack.c.l.b16 %v229
  %v262 = vunpack.c.l.b16 %v230
  %v263 = vunpack.c.l.b16 %v231
  %v264 = vunpack.c.l.b16 %v232
  %v265 = vpack.c.b16 %v250, %v249
  %v266 = vpack.c.b16 %v252, %v251
  %v267 = vpack.c.b16 %v254, %v253
  %v268 = vpack.c.b16 %v256, %v255
  %v269 = vpack.c.b16 %v258, %v257
  %v270 = vpack.c.b16 %v260, %v259
  %v271 = vpack.c.b16 %v262, %v261
  %v272 = vpack.c.b16 %v264, %v263
  %281 = vmatprep.subr.bf16.mxu0 0
  %282 = vmatpush1.bf16.msra.mxu0 %v265
  %283 = vmatprep.subr.bf16.mxu0 0
  %284 = vmatpush1.bf16.msra.mxu0 %v266
  %285 = vmatprep.subr.bf16.mxu0 0
  %286 = vmatpush1.bf16.msra.mxu0 %v267
  %287 = vmatprep.subr.bf16.mxu0 0
  %288 = vmatpush1.bf16.msra.mxu0 %v268
  %289 = vmatprep.subr.bf16.mxu0 0
  %290 = vmatpush1.bf16.msra.mxu0 %v269
  %291 = vmatprep.subr.bf16.mxu0 0
  %292 = vmatpush1.bf16.msra.mxu0 %v270
  %293 = vmatprep.subr.bf16.mxu0 0
  %294 = vmatpush1.bf16.msra.mxu0 %v271
  %295 = vmatprep.subr.bf16.mxu0 0
  %296 = vmatpush1.bf16.msra.mxu0 %v272
  %297 = vmatprep.subr.bf16.mxu0 0
  %298 = vmatpush1.bf16.msra.mxu0 0
  %299 = vmatprep.subr.bf16.mxu0 0
  %300 = vmatpush1.bf16.msra.mxu0 0
  %301 = vmatprep.subr.bf16.mxu0 0
  %302 = vmatpush1.bf16.msra.mxu0 0
  %303 = vmatprep.subr.bf16.mxu0 0
  %304 = vmatpush1.bf16.msra.mxu0 0
  %305 = vmatprep.subr.bf16.mxu0 0
  %306 = vmatpush1.bf16.msra.mxu0 0
  %307 = vmatprep.subr.bf16.mxu0 0
  %308 = vmatpush1.bf16.msra.mxu0 0
  %309 = vmatprep.subr.bf16.mxu0 0
  %310 = vmatpush1.bf16.msra.mxu0 0
  %311 = vmatprep.subr.bf16.mxu0 0
  %312 = vmatpush1.bf16.msra.mxu0 0
  %313 = vmatprep.mubr.bf16.mxu0 0
  %314 = vmatmul.mubr.bf16.gmra.mrb[0].mxu0 %v216
  %v315 = vpop.f32.mrb[0].mxu0
  %v316 = vadd.f32 0.0, %v315
  %v317 = vpop.f32.mrb[0].mxu0
  %v318 = vpop.f32.mrb[0].mxu0
  %v319 = vadd.f32 0.0, %v318
  %v320 = vpop.f32.mrb[0].mxu0
  %321 = vdwg.mxu0
  %v322 = vadd.f32 %v214, %v316
  %v323 = vadd.f32 %v215, %v319
  %324 = vst [vmem:[#allocation3] sm:$0xff] %v322
  %325 = vst [vmem:[#allocation3 + $0x8] sm:$0xff] %v323
  // Predicated region
  $region34: #{block_forward.1} parent=0 // pred_check
    %p326 = pneg %p27
  $region35: #{block_forward.1} parent=0 // pred_check_branch
    %328 = sbr.rel (%p326) target = $region37
  $region36: #{block_forward.1} parent=0 // pred_region
    %v329 = vld [vmem:[%s0] sm:$0xff]
    %v330 = vld [vmem:[%s0 + $0x8] sm:$0xff]
    %v331 = vld [vmem:[#allocation3] sm:$0xff]
    %v332 = vld [vmem:[#allocation3 + $0x8] sm:$0xff]
    %v333 = vadd.f32 %v329, %v331
    %v334 = vadd.f32 %v330, %v332
    %v335 = vld [vmem:[%s6] sm:$0x1]
    %v337 = vlaneseq
    %v338 = vshrl.u32 %v337, 7
    %v339 = vsub.s32 0, %v338
    %v340 = vrot.slane %v335, %v339
    %v342 = vadd.f32 %v333, %v340
    %v343 = vadd.f32 %v334, %v340
    %344 = vst [vmem:[%s7] sm:$0xff] %v342
    %345 = vst [vmem:[%s7 + $0x8] sm:$0xff] %v343
  $region37: #{block_forward.1} parent=0 // pred_fallthru
    _
  // Predicated region
  $region38: #{block_forward.1} parent=0 // pred_check
    _
  $region39: #{block_forward.1} parent=0 // pred_check_branch
    %347 = sbr.rel (0) target = $region41
  $region40: #{block_forward.1} parent=0 // pred_region
    _
  $region41: #{block_forward.1} parent=0 // pred_fallthru
    _
  // Predicated region
  $region42: #{block_forward.1} parent=0 // pred_check
    _
  $region43: #{block_forward.1} parent=0 // pred_check_branch
    %349 = sbr.rel (0) target = $region45
  $region44: #{block_forward.1} parent=0 // pred_region
    _
  $region45: #{block_forward.1} parent=0 // pred_fallthru
    _

</llo_original>
